<compile_context>
chip_gen: v5e
topology: v5e:2x2
jax: 0.10.0
libtpu: 0.0.40
codegen_flags: <defaults>
</compile_context>

<pallas_src>
import functools

import jax
import jax.numpy as jnp
from jax import lax
from jax.experimental import pallas as pl
from jax.experimental.pallas import tpu as pltpu

# Large finite negative for masking (avoids NaN paths fully-masked rows could hit
# with a true -inf mask).
_MASK_VALUE = -1e30
_LANE = 128


# ---------------------------------------------------------------------------
# Kernel 1: fused Q|K|V projection   qkv_tile = x_tile @ [Wq^T*scale | Wk^T | Wv^T]
# ---------------------------------------------------------------------------
def _qkv_proj_kernel(x_ref, w_ref, q_ref, k_ref, v_ref):
    # x_ref: (tp, C) bf16, w_ref: (C, 3*Hp) bf16 (resident; constant index map)
    hp = q_ref.shape[-1]
    x = x_ref[...].astype(w_ref.dtype)
    qkv = jnp.dot(x, w_ref[...], preferred_element_type=jnp.float32)   # (tp, 3*Hp)
    # Lane slices at 128-multiples; padded head columns are exact zeros.
    q_ref[...] = qkv[:, :hp].astype(q_ref.dtype)
    k_ref[...] = qkv[:, hp:2 * hp].astype(k_ref.dtype)
    v_ref[...] = qkv[:, 2 * hp:].astype(v_ref.dtype)


def _project_qkv(x_c, w_qkv_p, hp, *, block_t, compute_dtype, vmem_limit_bytes):
    B, T, C = x_c.shape
    nt = T // block_t
    grid_spec = pltpu.PrefetchScalarGridSpec(
        num_scalar_prefetch=0,
        grid=(B, nt),
        in_specs=[
            pl.BlockSpec((pl.Squeezed(), block_t, C), lambda b, t: (b, t, 0)),
            pl.BlockSpec((C, 3 * hp), lambda b, t: (0, 0)),
        ],
        out_specs=[
            pl.BlockSpec((pl.Squeezed(), block_t, hp), lambda b, t: (b, t, 0)),
            pl.BlockSpec((pl.Squeezed(), block_t, hp), lambda b, t: (b, t, 0)),
            pl.BlockSpec((pl.Squeezed(), block_t, hp), lambda b, t: (b, t, 0)),
        ],
    )
    out_shape = tuple(jax.ShapeDtypeStruct((B, T, hp), compute_dtype)
                      for _ in range(3))
    return pl.pallas_call(
        _qkv_proj_kernel,
        out_shape=out_shape,
        grid_spec=grid_spec,
        compiler_params=pltpu.CompilerParams(
            dimension_semantics=("parallel", "parallel"),
            vmem_limit_bytes=vmem_limit_bytes),
    )(x_c, w_qkv_p)


# ---------------------------------------------------------------------------
# Kernel 2: flash attention (online softmax) over pre-projected Q/K/V tiles
# ---------------------------------------------------------------------------
def _flash_attn_kernel(q_ref, k_ref, v_ref, o_ref, m_scr, l_scr, acc_scr,
                       *, head_size, block_q, block_k):
    # q_ref: (tq, Hp) bf16 (resident across the kv loop; scale pre-folded)
    # k_ref/v_ref: (tk, Hp) bf16      o_ref: (tq, head_size) (unpadded output)
    qi = pl.program_id(1)
    ki = pl.program_id(2)
    nk = pl.num_programs(2)

    @pl.when(ki == 0)
    def _init():
        m_scr[...] = jnp.full_like(m_scr, -jnp.inf)
        l_scr[...] = jnp.zeros_like(l_scr)
        acc_scr[...] = jnp.zeros_like(acc_scr)

    q_start = qi * block_q
    k_start = ki * block_k
    # Tile intersects the causal (lower-triangular) region at all?
    intersects = k_start <= q_start + block_q - 1
    # Tile lies entirely on/below the diagonal (no per-element mask needed)?
    fully_unmasked = k_start + block_k - 1 <= q_start

    def online_softmax_update(masked):
        # Scores: contract over the head dim directly (no explicit k transpose).
        s = lax.dot_general(
            q_ref[...], k_ref[...],
            dimension_numbers=(((1,), (1,)), ((), ())),
            preferred_element_type=jnp.float32)                     # (tq, tk) f32
        if masked:
            row = q_start + lax.broadcasted_iota(jnp.int32, (block_q, block_k), 0)
            col = k_start + lax.broadcasted_iota(jnp.int32, (block_q, block_k), 1)
            s = jnp.where(col <= row, s, _MASK_VALUE)
        m_prev = m_scr[...]
        m_new = jnp.maximum(m_prev, jnp.max(s, axis=-1, keepdims=True))
        alpha = jnp.exp(m_prev - m_new)
        p = jnp.exp(s - m_new)
        l_scr[...] = alpha * l_scr[...] + jnp.sum(p, axis=-1, keepdims=True)
        acc_scr[...] = alpha * acc_scr[...] + jnp.dot(
            p.astype(v_ref.dtype), v_ref[...], preferred_element_type=jnp.float32)
        m_scr[...] = m_new

    # Unmasked fast path (most tiles when nq is large).
    @pl.when(fully_unmasked)
    def _fast_path():
        online_softmax_update(masked=False)

    # Masked path only for tiles crossing the diagonal.
    @pl.when(jnp.logical_and(intersects, jnp.logical_not(fully_unmasked)))
    def _diag_path():
        online_softmax_update(masked=True)

    @pl.when(ki == nk - 1)
    def _finalize():
        inv_l = pl.reciprocal(l_scr[...], approx=True)
        out = acc_scr[...] * inv_l                                  # (tq, Hp) f32
        o_ref[...] = out[:, :head_size].astype(o_ref.dtype)


# ---------------------------------------------------------------------------
# Weight prep + forward wrapper
# ---------------------------------------------------------------------------
def prepare_head_params(w_key, w_query, w_value, *, lane=_LANE,
                        compute_dtype=jnp.bfloat16):
    """PyTorch-layout (head_size, n_embd) bias-free Linear weights -> ONE fused,
    pre-transposed, zero-padded (C, 3*Hp) weight  [Wq^T*scale | Wk^T | Wv^T]  in
    the MXU input dtype.  The 1/sqrt(head_size) score scale is folded into Wq."""
    h, _ = w_key.shape
    hp = ((h + lane - 1) // lane) * lane
    scale = h ** -0.5

    def prep(w, s=1.0):
        wt = (w.T * s).astype(compute_dtype)            # (C, H)
        return jnp.pad(wt, ((0, 0), (0, hp - h)))       # (C, Hp), zero columns

    return jnp.concatenate(
        [prep(w_query, scale), prep(w_key), prep(w_value)], axis=1)


def head_forward(x, w_qkv_p, head_size, *,
                 block_q=None, block_k=None, block_proj=None,
                 compute_dtype=jnp.bfloat16,
                 vmem_limit_bytes=32 * 1024 * 1024):
    """x: (B, T, C). w_qkv_p from prepare_head_params. Returns (B, T, head_size)."""
    B, T, C = x.shape
    assert w_qkv_p.shape[0] == C and w_qkv_p.shape[1] % (3 * _LANE) == 0
    Hp = w_qkv_p.shape[1] // 3
    out_dtype = x.dtype

    # 256-blocks fill the MXU on all generations while staying well within the
    # scoped-VMEM default.  On v6e (and v7x, if B*nq >= 2 still holds and the
    # budget is rechecked against 64 MiB/TC) pass 512 explicitly for long T.
    block_q = block_q if block_q is not None else min(T, 256)
    block_k = block_k if block_k is not None else min(T, 256)
    block_proj = block_proj if block_proj is not None else min(T, 256)
    assert T % block_q == 0 and T % block_k == 0 and T % block_proj == 0, \
        "T must divide into tiles"
    nq, nk = T // block_q, T // block_k

    # bf16 HBM traffic for x; all f32 accumulation happens in-kernel.
    x_c = x.astype(compute_dtype)

    # --- Stage 1: project Q/K/V once per token (no redundant MXU work later). ---
    q, k, v = _project_qkv(x_c, w_qkv_p, Hp, block_t=block_proj,
                           compute_dtype=compute_dtype,
                           vmem_limit_bytes=vmem_limit_bytes)

    # --- Stage 2: flash attention over the projected tiles. ---
    def kv_index(b, qi, ki):
        # Clamp to the last kv block that intersects this q block: skipped
        # upper-triangle grid steps reuse the previous block -> no DMA issued.
        last_needed = ((qi + 1) * block_q - 1) // block_k
        return (b, jnp.minimum(ki, last_needed), 0)

    kernel = functools.partial(_flash_attn_kernel, head_size=head_size,
                               block_q=block_q, block_k=block_k)

    grid_spec = pltpu.PrefetchScalarGridSpec(
        num_scalar_prefetch=0,
        grid=(B, nq, nk),
        in_specs=[
            # Q tile: block index constant over ki -> resident across the kv loop.
            pl.BlockSpec((pl.Squeezed(), block_q, Hp), lambda b, qi, ki: (b, qi, 0)),
            pl.BlockSpec((pl.Squeezed(), block_k, Hp), kv_index),   # K tile
            pl.BlockSpec((pl.Squeezed(), block_k, Hp), kv_index),   # V tile
        ],
        # Unpadded output block (last dim == full array dim): no 8x padded HBM
        # write and no wrapper-side slice copy.
        out_specs=pl.BlockSpec((pl.Squeezed(), block_q, head_size),
                               lambda b, qi, ki: (b, qi, 0)),
        scratch_shapes=[
            pltpu.VMEM((block_q, 1), jnp.float32),    # running max m
            pltpu.VMEM((block_q, 1), jnp.float32),    # running denom l
            pltpu.VMEM((block_q, Hp), jnp.float32),   # output accumulator
        ],
    )

    return pl.pallas_call(
        kernel,
        out_shape=jax.ShapeDtypeStruct((B, T, head_size), out_dtype),
        grid_spec=grid_spec,
        compiler_params=pltpu.CompilerParams(
            dimension_semantics=("parallel", "parallel", "arbitrary"),
            vmem_limit_bytes=vmem_limit_bytes),
    )(q, k, v)


def head_reference(x, w_key, w_query, w_value):
    """Pure-JAX f32 reference mirroring the PyTorch forward (eval mode)."""
    k = x @ w_key.T
    q = x @ w_query.T
    v = x @ w_value.T
    wei = (q @ jnp.swapaxes(k, -2, -1)) * (k.shape[-1] ** -0.5)
    T = x.shape[1]
    tril = jnp.tril(jnp.ones((T, T), dtype=bool))
    wei = jnp.where(tril, wei, -jnp.inf)
    wei = jax.nn.softmax(wei, axis=-1)
    return wei @ v


if __name__ == "__main__":
    # Small shapes consistent with the module: B=2, T(block_size)=8, C=32, H=16.
    B, T = 2, 8
    n_embd, head_size = 32, 16
    dropout = 0.0               # eval mode -> identity anyway

    key = jax.random.PRNGKey(0)
    kx, kk, kq, kv, kx2, kk2, kq2, kv2 = jax.random.split(key, 8)

    x = jax.random.normal(kx, (B, T, n_embd), dtype=jnp.float32)
    # Bias-free Linear weights in PyTorch layout: (out_features, in_features).
    w_key   = jax.random.normal(kk, (head_size, n_embd), dtype=jnp.float32) * 0.1
    w_query = jax.random.normal(kq, (head_size, n_embd), dtype=jnp.float32) * 0.1
    w_value = jax.random.normal(kv, (head_size, n_embd), dtype=jnp.float32) * 0.1

    # Weight prep (transpose / pad / fuse / fold-scale / cast) once, off hot path.
    w_qkv_p = prepare_head_params(w_key, w_query, w_value)

    out = head_forward(x, w_qkv_p, head_size)
    jax.block_until_ready(out)
    ref = head_reference(x, w_key, w_query, w_value)
    assert out.shape == (B, T, head_size)
    assert jnp.allclose(out, ref, atol=3e-2, rtol=3e-2), "mismatch vs reference"

    # Multi-tile check: exercises the unmasked fast path, the diagonal masked
    # path, the causal tile skip, and the clamped kv index_map.
    B2, T2, C2 = 2, 256, 64
    x2 = jax.random.normal(kx2, (B2, T2, C2), dtype=jnp.float32)
    w_k2 = jax.random.normal(kk2, (head_size, C2), dtype=jnp.float32) * 0.1
    w_q2 = jax.random.normal(kq2, (head_size, C2), dtype=jnp.float32) * 0.1
    w_v2 = jax.random.normal(kv2, (head_size, C2), dtype=jnp.float32) * 0.1
    w_qkv_p2 = prepare_head_params(w_k2, w_q2, w_v2)
    out2 = head_forward(x2, w_qkv_p2, head_size, block_q=128, block_k=128)
    jax.block_until_ready(out2)
    ref2 = head_reference(x2, w_k2, w_q2, w_v2)
    assert jnp.allclose(out2, ref2, atol=3e-2, rtol=3e-2), "mismatch (tiled)"

    print("KERNEL_OK")
</pallas_src>

<mosaic_0001>
module attributes {stable_mosaic.version = 11 : i64} {
  func.func @_qkv_proj_kernel(%arg0: i32, %arg1: i32, %arg2: memref<1x8x32xbf16, #tpu.memory_space<vmem>>, %arg3: memref<32x384xbf16, #tpu.memory_space<vmem>>, %arg4: memref<1x8x128xbf16, #tpu.memory_space<vmem>>, %arg5: memref<1x8x128xbf16, #tpu.memory_space<vmem>>, %arg6: memref<1x8x128xbf16, #tpu.memory_space<vmem>>) attributes {dimension_semantics = [#tpu.dimension_semantics<parallel>, #tpu.dimension_semantics<parallel>], iteration_bounds = array<i64: 2, 1>, scalar_prefetch = 0 : i64, scratch_operands = 0 : i64, tpu.core_type = #tpu.core_type<tc>, window_params = [{transform_indices = @transform_0, window_bounds = array<i64: 1, 8, 32>}, {pipeline_mode = #tpu.pipeline_mode<synchronous>, transform_indices = @transform_1, window_bounds = array<i64: 32, 384>}, {transform_indices = @transform_2, window_bounds = array<i64: 1, 8, 128>}, {transform_indices = @transform_3, window_bounds = array<i64: 1, 8, 128>}, {transform_indices = @transform_4, window_bounds = array<i64: 1, 8, 128>}]} {
    %c0 = arith.constant 0 : index
    %c0_0 = arith.constant 0 : index
    %c0_1 = arith.constant 0 : index
    %0 = vector.load %arg2[%c0, %c0_0, %c0_1] : memref<1x8x32xbf16, #tpu.memory_space<vmem>>, vector<1x8x32xbf16>
    %1 = vector.shape_cast %0 : vector<1x8x32xbf16> to vector<8x32xbf16>
    %c0_2 = arith.constant 0 : index
    %c0_3 = arith.constant 0 : index
    %2 = vector.load %arg3[%c0_2, %c0_3] : memref<32x384xbf16, #tpu.memory_space<vmem>>, vector<32x384xbf16>
    %cst = arith.constant dense<0.000000e+00> : vector<8x384xf32>
    %3 = tpu.matmul %1, %2, %cst {dimension_numbers = #tpu.dot_dimension_numbers<[1], [0], [0], [1], [0, 0, 1, 1], [], []>} : vector<8x32xbf16>, vector<32x384xbf16>, vector<8x384xf32> -> vector<8x384xf32>
    %4 = vector.extract_strided_slice %3 {offsets = [0, 0], sizes = [8, 128], strides = [1, 1]} : vector<8x384xf32> to vector<8x128xf32>
    %5 = arith.truncf %4 : vector<8x128xf32> to vector<8x128xbf16>
    %c0_4 = arith.constant 0 : index
    %c0_5 = arith.constant 0 : index
    %c0_6 = arith.constant 0 : index
    %6 = vector.load %arg4[%c0_4, %c0_5, %c0_6] : memref<1x8x128xbf16, #tpu.memory_space<vmem>>, vector<1x8x128xbf16>
    %7 = vector.shape_cast %6 : vector<1x8x128xbf16> to vector<8x128xbf16>
    %8 = vector.shape_cast %5 : vector<8x128xbf16> to vector<1x8x128xbf16>
    tpu.vector_store %arg4[%c0_4, %c0_5, %c0_6], %8 {strides = array<i32>} : memref<1x8x128xbf16, #tpu.memory_space<vmem>>, vector<1x8x128xbf16>,
    %9 = vector.extract_strided_slice %3 {offsets = [0, 128], sizes = [8, 128], strides = [1, 1]} : vector<8x384xf32> to vector<8x128xf32>
    %10 = arith.truncf %9 : vector<8x128xf32> to vector<8x128xbf16>
    %c0_7 = arith.constant 0 : index
    %c0_8 = arith.constant 0 : index
    %c0_9 = arith.constant 0 : index
    %11 = vector.load %arg5[%c0_7, %c0_8, %c0_9] : memref<1x8x128xbf16, #tpu.memory_space<vmem>>, vector<1x8x128xbf16>
    %12 = vector.shape_cast %11 : vector<1x8x128xbf16> to vector<8x128xbf16>
    %13 = vector.shape_cast %10 : vector<8x128xbf16> to vector<1x8x128xbf16>
    tpu.vector_store %arg5[%c0_7, %c0_8, %c0_9], %13 {strides = array<i32>} : memref<1x8x128xbf16, #tpu.memory_space<vmem>>, vector<1x8x128xbf16>,
    %14 = vector.extract_strided_slice %3 {offsets = [0, 256], sizes = [8, 128], strides = [1, 1]} : vector<8x384xf32> to vector<8x128xf32>
    %15 = arith.truncf %14 : vector<8x128xf32> to vector<8x128xbf16>
    %c0_10 = arith.constant 0 : index
    %c0_11 = arith.constant 0 : index
    %c0_12 = arith.constant 0 : index
    %16 = vector.load %arg6[%c0_10, %c0_11, %c0_12] : memref<1x8x128xbf16, #tpu.memory_space<vmem>>, vector<1x8x128xbf16>
    %17 = vector.shape_cast %16 : vector<1x8x128xbf16> to vector<8x128xbf16>
    %18 = vector.shape_cast %15 : vector<8x128xbf16> to vector<1x8x128xbf16>
    tpu.vector_store %arg6[%c0_10, %c0_11, %c0_12], %18 {strides = array<i32>} : memref<1x8x128xbf16, #tpu.memory_space<vmem>>, vector<1x8x128xbf16>,
    return
  }
  func.func @transform_0(%arg0: i32, %arg1: i32) -> (i32, i32, i32) {
    %c0_i32 = arith.constant 0 : i32
    %c0_i32_0 = arith.constant 0 : i32
    return %arg0, %arg1, %c0_i32 : i32, i32, i32
  }
  func.func @transform_1(%arg0: i32, %arg1: i32) -> (i32, i32) {
    %c0_i32 = arith.constant 0 : i32
    %c0_i32_0 = arith.constant 0 : i32
    %c0_i32_1 = arith.constant 0 : i32
    return %c0_i32, %c0_i32_0 : i32, i32
  }
  func.func @transform_2(%arg0: i32, %arg1: i32) -> (i32, i32, i32) {
    %c0_i32 = arith.constant 0 : i32
    %c0_i32_0 = arith.constant 0 : i32
    return %arg0, %arg1, %c0_i32 : i32, i32, i32
  }
  func.func @transform_3(%arg0: i32, %arg1: i32) -> (i32, i32, i32) {
    %c0_i32 = arith.constant 0 : i32
    %c0_i32_0 = arith.constant 0 : i32
    return %arg0, %arg1, %c0_i32 : i32, i32, i32
  }
  func.func @transform_4(%arg0: i32, %arg1: i32) -> (i32, i32, i32) {
    %c0_i32 = arith.constant 0 : i32
    %c0_i32_0 = arith.constant 0 : i32
    return %arg0, %arg1, %c0_i32 : i32, i32, i32
  }
}

</mosaic_0001>

<llo_original>
// kernel: tpu_custom_call.1
$region0: #{tpu_custom_call.1}
  #allocation0 [shape = 'u32[]', space=smem, size = 0x4, offset = 0x4, fixed_abs, tag = 'smem constant byte address 0x4 - core index']
  #allocation1 [shape = 'u32[72,128]{1,0:T(1,128)}', space=vmem, size = 0x9000, scoped, tag = 'internal scratch']
  %s0 = inlined_call_operand.hbm [shape: bf16[2,8,32], index: 0, kind: input, shape index: {}]
  %s1 = inlined_call_operand.hbm [shape: bf16[32,384], index: 1, kind: input, shape index: {}]
  %s2 = inlined_call_operand.hbm [shape: bf16[2,8,128], index: 2, kind: output, shape index: {0}]
  %s3 = inlined_call_operand.hbm [shape: bf16[2,8,128], index: 3, kind: output, shape index: {1}]
  %s4 = inlined_call_operand.hbm [shape: bf16[2,8,128], index: 4, kind: output, shape index: {2}]
  %5 = xla_tuple %s2, %s3, %s4
  %s6 = sld [smem:[#allocation0]]
  $region65: #{tpu_custom_call.1} parent=0
    _
  %s8 = ssub.s32 1, %s6
  %s9 = scalar_select 0, %s8, %s6
  $region1: #{tpu_custom_call.1} parent=0
    #allocation2 [shape = 'u8[4096]{0}', space=vmem, size = 0x1000, scoped, tag = 'input window, operand 0']
    #allocation3 [shape = 's32[2]{0}', space=sflag, size = 0x8, scoped, tag = 'scoped memory for tpu_custom_call.1']
    #allocation4 [shape = 's32[2]{0}', space=sflag, size = 0x8, scoped, tag = 'scoped memory for tpu_custom_call.1']
    #allocation5 [shape = 'u8[24576]{0}', space=vmem, size = 0x6000, scoped, tag = 'input window, operand 1, single buffered']
    #allocation6 [shape = 's32[1]{0}', space=sflag, size = 0x4, scoped, tag = 'scoped memory for tpu_custom_call.1']
    #allocation7 [shape = 'u8[4096]{0}', space=vmem, size = 0x1000, scoped, tag = 'output window, operand 0']
    #allocation8 [shape = 'u8[4096]{0}', space=vmem, size = 0x1000, scoped, tag = 'output window, operand 1']
    #allocation9 [shape = 's32[2]{0}', space=sflag, size = 0x8, scoped, tag = 'scoped memory for tpu_custom_call.1']
    #allocation10 [shape = 'u8[4096]{0}', space=vmem, size = 0x1000, scoped, tag = 'output window, operand 2']
    %10 = vsyncpa [#allocation3], 0
    %s11 = scalar_lea.sflag [#allocation3], 1
    %12 = vsyncpa %s11, 0
    %13 = vsyncpa [#allocation6], 0
    %14 = vsyncpa [#allocation4], 0
    %s15 = scalar_lea.sflag [#allocation4], 1
    %16 = vsyncpa %s15, 0
    %17 = vsyncpa [#allocation9], 0
    %s18 = scalar_lea.sflag [#allocation9], 1
    %19 = vsyncpa %s18, 0
    loop: start=0, step=1, limit=4
    $region2: #{tpu_custom_call.1} parent=1 // loop_pre_header
      _
    $region3: #{tpu_custom_call.1} parent=1 // loop_header
      %s21 = sphi 0, %s25
      %p22 = scmp.ge.s32.totalorder %s21, 4
      %s28 = sphi 0, %s40
      %s29 = sphi 0, %s36
      %s30 = sphi 0, %s28
      %s31 = sphi 0, %s29
      %s32 = sphi 0, %s30
      %s33 = sphi 0, %s31
      %s45 = sphi 0, %s47
      %s48 = sphi 0, %s45
      %s49 = sphi 0, %s48
      %s65 = sphi 0, %s49
      %s69 = sphi 0, %s69
      %s71 = sphi 0, %s69
      %s72 = sphi 0, %s71
      %s86 = sphi 0, %s72
      %s94 = sphi 0, %s96
      %s97 = sphi 0, %s94
      %s98 = sphi 0, %s97
      %s114 = sphi 0, %s98
      %s122 = sphi 0, %s124
      %s125 = sphi 0, %s122
      %s126 = sphi 0, %s125
      %s142 = sphi 0, %s126
      %s150 = sphi 0, %s152
      %s153 = sphi 0, %s150
      %s154 = sphi 0, %s153
      %s170 = sphi 0, %s154
    $region4: #{tpu_custom_call.1} parent=1 // loop_header_branch
      %24 = sbr.rel (%p22) target = $region8
    $region5: #{tpu_custom_call.1} parent=1 // loop_body
      %s26 = ssub.s32 %s21, 1
      %s27 = ssub.s32 %s21, 2
      %s34 = sadd.s32 1, %s29
      %p35 = scmp.ge.s32.totalorder %s34, 1
      %s36 = scalar_select %p35, 0, %s34
      %s37 = sadd.s32 1, %s28
      %s38 = scalar_select %p35, %s37, %s28
      %p39 = scmp.ge.s32.totalorder %s38, 2
      %s40 = scalar_select %p39, 0, %s38
      %s41 = ssub.s32 %s28, %s40
      %s42 = ssub.s32 %s29, %s36
      %s43 = sor.u32 %s41, %s42
      %p44 = scmp.eq.s32.totalorder %s43, 0
      %s46 = sadd.s32 %s45, 1
      %s47 = scalar_select %p44, %s45, %s46
      %p50 = pneg %p44
      %p51 = scmp.eq.s32.totalorder %s21, 1
      %p52 = por %p50, %p51
      %p53 = scmp.ne.s32.totalorder %s45, %s48
      %p54 = scmp.eq.s32.totalorder %s21, 0
      %p55 = por %p53, %p54
      %p56 = scmp.ne.s32.totalorder %s45, %s48
      %p57 = scmp.eq.s32.totalorder %s26, 1
      %p58 = por %p56, %p57
      %p59 = scmp.ne.s32.totalorder %s48, %s49
      %p60 = scmp.eq.s32.totalorder %s26, 0
      %p61 = por %p59, %p60
      %p62 = scmp.ne.s32.totalorder %s48, %s49
      %p63 = scmp.eq.s32.totalorder %s27, 1
      %p64 = por %p62, %p63
      %p66 = scmp.ne.s32.totalorder %s49, %s65
      %p67 = scmp.eq.s32.totalorder %s27, 0
      %p68 = por %p66, %p67
      %s70 = sadd.s32 %s69, 1
      %p73 = scmp.eq.s32.totalorder %s21, 1
      %p74 = scmp.ne.s32.totalorder %s69, %s71
      %p75 = scmp.eq.s32.totalorder %s21, 0
      %p76 = por %p74, %p75
      %p77 = scmp.ne.s32.totalorder %s69, %s71
      %p78 = scmp.eq.s32.totalorder %s26, 1
      %p79 = por %p77, %p78
      %p80 = scmp.ne.s32.totalorder %s71, %s72
      %p81 = scmp.eq.s32.totalorder %s26, 0
      %p82 = por %p80, %p81
      %p83 = scmp.ne.s32.totalorder %s71, %s72
      %p84 = scmp.eq.s32.totalorder %s27, 1
      %p85 = por %p83, %p84
      %p87 = scmp.ne.s32.totalorder %s72, %s86
      %p88 = scmp.eq.s32.totalorder %s27, 0
      %p89 = por %p87, %p88
      %s90 = ssub.s32 %s28, %s40
      %s91 = ssub.s32 %s29, %s36
      %s92 = sor.u32 %s90, %s91
      %p93 = scmp.eq.s32.totalorder %s92, 0
      %s95 = sadd.s32 %s94, 1
      %s96 = scalar_select %p93, %s94, %s95
      %p99 = pneg %p93
      %p100 = scmp.eq.s32.totalorder %s21, 1
      %p101 = por %p99, %p100
      %p102 = scmp.ne.s32.totalorder %s94, %s97
      %p103 = scmp.eq.s32.totalorder %s21, 0
      %p104 = por %p102, %p103
      %p105 = scmp.ne.s32.totalorder %s94, %s97
      %p106 = scmp.eq.s32.totalorder %s26, 1
      %p107 = por %p105, %p106
      %p108 = scmp.ne.s32.totalorder %s97, %s98
      %p109 = scmp.eq.s32.totalorder %s26, 0
      %p110 = por %p108, %p109
      %p111 = scmp.ne.s32.totalorder %s97, %s98
      %p112 = scmp.eq.s32.totalorder %s27, 1
      %p113 = por %p111, %p112
      %p115 = scmp.ne.s32.totalorder %s98, %s114
      %p116 = scmp.eq.s32.totalorder %s27, 0
      %p117 = por %p115, %p116
      %s118 = ssub.s32 %s28, %s40
      %s119 = ssub.s32 %s29, %s36
      %s120 = sor.u32 %s118, %s119
      %p121 = scmp.eq.s32.totalorder %s120, 0
      %s123 = sadd.s32 %s122, 1
      %s124 = scalar_select %p121, %s122, %s123
      %p127 = pneg %p121
      %p128 = scmp.eq.s32.totalorder %s21, 1
      %p129 = por %p127, %p128
      %p130 = scmp.ne.s32.totalorder %s122, %s125
      %p131 = scmp.eq.s32.totalorder %s21, 0
      %p132 = por %p130, %p131
      %p133 = scmp.ne.s32.totalorder %s122, %s125
      %p134 = scmp.eq.s32.totalorder %s26, 1
      %p135 = por %p133, %p134
      %p136 = scmp.ne.s32.totalorder %s125, %s126
      %p137 = scmp.eq.s32.totalorder %s26, 0
      %p138 = por %p136, %p137
      %p139 = scmp.ne.s32.totalorder %s125, %s126
      %p140 = scmp.eq.s32.totalorder %s27, 1
      %p141 = por %p139, %p140
      %p143 = scmp.ne.s32.totalorder %s126, %s142
      %p144 = scmp.eq.s32.totalorder %s27, 0
      %p145 = por %p143, %p144
      %s146 = ssub.s32 %s28, %s40
      %s147 = ssub.s32 %s29, %s36
      %s148 = sor.u32 %s146, %s147
      %p149 = scmp.eq.s32.totalorder %s148, 0
      %s151 = sadd.s32 %s150, 1
      %s152 = scalar_select %p149, %s150, %s151
      %p155 = pneg %p149
      %p156 = scmp.eq.s32.totalorder %s21, 1
      %p157 = por %p155, %p156
      %p158 = scmp.ne.s32.totalorder %s150, %s153
      %p159 = scmp.eq.s32.totalorder %s21, 0
      %p160 = por %p158, %p159
      %p161 = scmp.ne.s32.totalorder %s150, %s153
      %p162 = scmp.eq.s32.totalorder %s26, 1
      %p163 = por %p161, %p162
      %p164 = scmp.ne.s32.totalorder %s153, %s154
      %p165 = scmp.eq.s32.totalorder %s26, 0
      %p166 = por %p164, %p165
      %p167 = scmp.ne.s32.totalorder %s153, %s154
      %p168 = scmp.eq.s32.totalorder %s27, 1
      %p169 = por %p167, %p168
      %p171 = scmp.ne.s32.totalorder %s154, %s170
      %p172 = scmp.eq.s32.totalorder %s27, 0
      %p173 = por %p171, %p172
      %p174 = scmp.le.s32.totalorder 1, %s21
      %p175 = scmp.lt.s32.totalorder %s21, 3
      %p176 = pnand %p174, %p175
      %p177 = pneg %p176
      // Predicated region
      $region9: #{tpu_custom_call.1} parent=5 // pred_check
        _
      $region10: #{tpu_custom_call.1} parent=5 // pred_check_branch
        %179 = sbr.rel (%p176) target = $region12
      $region11: #{tpu_custom_call.1} parent=5 // pred_region
        %s180 = ssub.s32 %s21, 1
        // Predicated region
        $region13: #{tpu_custom_call.1} parent=11 // pred_check
          %p181 = pneg %p82
        $region14: #{tpu_custom_call.1} parent=11 // pred_check_branch
          %183 = sbr.rel (%p181) target = $region16
        $region15: #{tpu_custom_call.1} parent=11 // pred_region
          %185 = vsyncadd [#allocation6], 0
          %s186 = sshll.u32 %s1, 4
          %s187 = int_to_ptr.hbm [resolvable:$true] %s186
          %s188 = sshll.u32 [#allocation5], 4
          %s189 = int_to_ptr.vmem [resolvable:$true] %s188
          %194 = dma.hbm_to_vmem [thread:$0]  %s187, 768, %s189, [#allocation6], 192, 192, 12
        $region16: #{tpu_custom_call.1} parent=11 // pred_fallthru
          _
      $region12: #{tpu_custom_call.1} parent=5 // pred_fallthru
        _
      %p195 = scmp.lt.s32.totalorder %s21, 2
      // Predicated region
      $region17: #{tpu_custom_call.1} parent=5 // pred_check
        %p196 = pneg %p195
      $region18: #{tpu_custom_call.1} parent=5 // pred_check_branch
        %198 = sbr.rel (%p196) target = $region20
      $region19: #{tpu_custom_call.1} parent=5 // pred_region
        // Predicated region
        $region21: #{tpu_custom_call.1} parent=19 // pred_check
          %p199 = pneg %p55
        $region22: #{tpu_custom_call.1} parent=19 // pred_check_branch
          %201 = sbr.rel (%p199) target = $region24
        $region23: #{tpu_custom_call.1} parent=19 // pred_region
          %s202 = sand.u32 %s45, 1
          %s203 = scalar_lea.sflag [#allocation3], %s202
          %s204 = sand.u32 %s45, 1
          %s205 = smul.addr %s204, 4
          %s206 = scalar_lea.vmem [#allocation2], %s205
          %208 = vsyncadd %s203, 0
          %s209 = sadd.s32 %s29, %s28
          %s210 = smul.addr %s209, 4
          %s211 = scalar_lea.hbm %s0, %s210
          %s213 = sshll.u32 %s211, 4
          %s214 = int_to_ptr.hbm [resolvable:$true] %s213
          %s215 = sshll.u32 %s206, 4
          %s216 = int_to_ptr.vmem [resolvable:$true] %s215
          %218 = dma.hbm_to_vmem [thread:$0]  %s214, 64, %s216, %s203
        $region24: #{tpu_custom_call.1} parent=19 // pred_fallthru
          _
      $region20: #{tpu_custom_call.1} parent=5 // pred_fallthru
        _
      %p219 = scmp.le.s32.totalorder 1, %s21
      %p220 = scmp.lt.s32.totalorder %s21, 3
      %p221 = pnand %p219, %p220
      %p222 = pneg %p221
      // Predicated region
      $region25: #{tpu_custom_call.1} parent=5 // pred_check
        _
      $region26: #{tpu_custom_call.1} parent=5 // pred_check_branch
        %224 = sbr.rel (%p221) target = $region28
      $region27: #{tpu_custom_call.1} parent=5 // pred_region
        %s225 = ssub.s32 %s21, 1
        %s226 = sand.u32 %s48, 1
        %s227 = scalar_lea.sflag [#allocation3], %s226
        %s228 = sand.u32 %s48, 1
        %s229 = smul.addr %s228, 4
        %s230 = scalar_lea.vmem [#allocation2], %s229
        // Predicated region
        $region29: #{tpu_custom_call.1} parent=27 // pred_check
          %p231 = pneg %p61
        $region30: #{tpu_custom_call.1} parent=27 // pred_check_branch
          %233 = sbr.rel (%p231) target = $region32
        $region31: #{tpu_custom_call.1} parent=27 // pred_region
          %235 = dma.done %s227, 64
        $region32: #{tpu_custom_call.1} parent=27 // pred_fallthru
          _
        // Predicated region
        $region33: #{tpu_custom_call.1} parent=27 // pred_check
          %p236 = pneg %p82
        $region34: #{tpu_custom_call.1} parent=27 // pred_check_branch
          %238 = sbr.rel (%p236) target = $region36
        $region35: #{tpu_custom_call.1} parent=27 // pred_region
          %240 = dma.done [#allocation6], 768
        $region36: #{tpu_custom_call.1} parent=27 // pred_fallthru
          _
        %s241 = sand.u32 %s48, 1
        %s242 = scalar_lea.sflag [#allocation3], %s241
        %s243 = sand.u32 %s48, 1
        %s244 = smul.addr %s243, 4
        %s245 = scalar_lea.vmem [#allocation2], %s244
        %p246 = pneg %p61
        %p247 = pneg %p58
        %p248 = pneg %p82
        %p249 = pneg %p79
        %p250 = pneg %p110
        %p251 = pneg %p107
        %s252 = sand.u32 %s97, 1
        %s253 = scalar_lea.sflag [#allocation4], %s252
        %s254 = sand.u32 %s97, 1
        %s255 = smul.addr %s254, 4
        %s256 = scalar_lea.vmem [#allocation7], %s255
        %p257 = pneg %p138
        %p258 = pneg %p135
        %s259 = sand.u32 %s26, 1
        %s260 = scalar_lea.sflag [#allocation9], %s259
        %s261 = sand.u32 %s125, 1
        %s262 = smul.addr %s261, 4
        %s263 = scalar_lea.vmem [#allocation8], %s262
        %p264 = pneg %p166
        %p265 = pneg %p163
        %s266 = sand.u32 %s26, 1
        %s267 = scalar_lea.sflag [#allocation9], %s266
        %s268 = sand.u32 %s153, 1
        %s269 = smul.addr %s268, 4
        %s270 = scalar_lea.vmem [#allocation10], %s269
        %v272 = vld [vmem:[%s230] sm:$0xf]
        %v273 = vld [vmem:[#allocation5] sm:$0xff]
        %v274 = vld [vmem:[#allocation5 + $0x8] sm:$0xf]
        %v275 = vld [vmem:[#allocation5 + $0xc] sm:$0xff]
        %v276 = vld [vmem:[#allocation5 + $0x14] sm:$0xf]
        %v277 = vld [vmem:[#allocation5 + $0x18] sm:$0xff]
        %v278 = vld [vmem:[#allocation5 + $0x20] sm:$0xf]
        %v279 = vld [vmem:[#allocation5 + $0x24] sm:$0xff]
        %v280 = vld [vmem:[#allocation5 + $0x2c] sm:$0xf]
        %v289 = vunpack.c.l.b16 %v273
        %v290 = vunpack.c.h.b16 %v273
        %v291 = vunpack.c.l.b16 %v274
        %v292 = vunpack.c.l.b16 %v275
        %v293 = vunpack.c.h.b16 %v275
        %v294 = vunpack.c.l.b16 %v276
        %v295 = vunpack.c.l.b16 %v277
        %v296 = vunpack.c.h.b16 %v277
        %v297 = vunpack.c.l.b16 %v278
        %v298 = vunpack.c.l.b16 %v279
        %v299 = vunpack.c.h.b16 %v279
        %v300 = vunpack.c.l.b16 %v280
        %v301 = vpack.c.b16 %v292, %v289
        %v302 = vpack.c.b16 %v293, %v290
        %v303 = vpack.c.b16 %v294, %v291
        %v304 = vpack.c.b16 %v298, %v295
        %v305 = vpack.c.b16 %v299, %v296
        %v306 = vpack.c.b16 %v300, %v297
        %vm313 = vcmask 261120
        %v315 = vsel %vm313, %v272, 0
        %317 = vmatpush.bf16.msra.mxu0 0
        %318 = vmatpush.bf16.msra.mxu0 0
        %319 = vmatpush.bf16.msra.mxu0 0
        %320 = vmatpush.bf16.msra.mxu0 0
        %321 = vmatpush.bf16.msra.mxu0 0
        %322 = vmatpush.bf16.msra.mxu0 0
        %323 = vmatpush.bf16.msra.mxu0 %v304
        %324 = vmatpush.bf16.msra.mxu0 %v301
        %325 = vmatmul.bf16.gmra.mxu0 %v315
        %v326 = vpop.f32.mrf.mxu0
        %v327 = vadd.f32 0.0, %v326
        %v328 = vpop.f32.mrf.mxu0
        %329 = vdwg.mxu0
        %330 = vmatpush.bf16.msra.mxu0 0
        %331 = vmatpush.bf16.msra.mxu0 0
        %332 = vmatpush.bf16.msra.mxu0 0
        %333 = vmatpush.bf16.msra.mxu0 0
        %334 = vmatpush.bf16.msra.mxu0 0
        %335 = vmatpush.bf16.msra.mxu0 0
        %336 = vmatpush.bf16.msra.mxu0 %v305
        %337 = vmatpush.bf16.msra.mxu0 %v302
        %338 = vmatmul.bf16.gmra.mxu0 %v315
        %v339 = vpop.f32.mrf.mxu0
        %v340 = vadd.f32 0.0, %v339
        %v341 = vpop.f32.mrf.mxu0
        %342 = vdwg.mxu0
        %343 = vmatpush.bf16.msra.mxu0 0
        %344 = vmatpush.bf16.msra.mxu0 0
        %345 = vmatpush.bf16.msra.mxu0 0
        %346 = vmatpush.bf16.msra.mxu0 0
        %347 = vmatpush.bf16.msra.mxu0 0
        %348 = vmatpush.bf16.msra.mxu0 0
        %349 = vmatpush.bf16.msra.mxu0 %v306
        %350 = vmatpush.bf16.msra.mxu0 %v303
        %351 = vmatmul.bf16.gmra.mxu0 %v315
        %v352 = vpop.f32.mrf.mxu0
        %v353 = vadd.f32 0.0, %v352
        %v354 = vpop.f32.mrf.mxu0
        %355 = vdwg.mxu0
        %v356 = vpack.c.bf16 %v327, %v327
        %357 = vst [vmem:[%s256] sm:$0xf] %v356
        %v358 = vpack.c.bf16 %v340, %v340
        %359 = vst [vmem:[%s263] sm:$0xf] %v358
        %v360 = vpack.c.bf16 %v353, %v353
        %361 = vst [vmem:[%s270] sm:$0xf] %v360
        %s362 = sand.u32 %s97, 1
        %s363 = scalar_lea.sflag [#allocation4], %s362
        %s364 = sand.u32 %s97, 1
        %s365 = smul.addr %s364, 4
        %s366 = scalar_lea.vmem [#allocation7], %s365
        %s367 = sand.u32 %s26, 1
        %s368 = scalar_lea.sflag [#allocation9], %s367
        %s369 = sand.u32 %s125, 1
        %s370 = smul.addr %s369, 4
        %s371 = scalar_lea.vmem [#allocation8], %s370
        %s372 = sand.u32 %s26, 1
        %s373 = scalar_lea.sflag [#allocation9], %s372
        %s374 = sand.u32 %s153, 1
        %s375 = smul.addr %s374, 4
        %s376 = scalar_lea.vmem [#allocation10], %s375
        // Predicated region
        $region37: #{tpu_custom_call.1} parent=27 // pred_check
          %p377 = pneg %p107
        $region38: #{tpu_custom_call.1} parent=27 // pred_check_branch
          %379 = sbr.rel (%p377) target = $region40
        $region39: #{tpu_custom_call.1} parent=27 // pred_region
          %381 = vsyncadd %s363, 0
          %s382 = sadd.s32 %s31, %s30
          %s383 = smul.addr %s382, 4
          %s384 = scalar_lea.hbm %s2, %s383
          %s386 = sshll.u32 %s366, 4
          %s387 = int_to_ptr.vmem [resolvable:$true] %s386
          %s388 = sshll.u32 %s384, 4
          %s389 = int_to_ptr.hbm [resolvable:$true] %s388
          %391 = dma.vmem_to_hbm [thread:$0]  %s387, 64, %s389, %s363
        $region40: #{tpu_custom_call.1} parent=27 // pred_fallthru
          _
        // Predicated region
        $region41: #{tpu_custom_call.1} parent=27 // pred_check
          %p392 = pneg %p135
        $region42: #{tpu_custom_call.1} parent=27 // pred_check_branch
          %394 = sbr.rel (%p392) target = $region44
        $region43: #{tpu_custom_call.1} parent=27 // pred_region
          %396 = vsyncadd %s368, 0
          %s397 = sadd.s32 %s31, %s30
          %s398 = smul.addr %s397, 4
          %s399 = scalar_lea.hbm %s3, %s398
          %s401 = sshll.u32 %s371, 4
          %s402 = int_to_ptr.vmem [resolvable:$true] %s401
          %s403 = sshll.u32 %s399, 4
          %s404 = int_to_ptr.hbm [resolvable:$true] %s403
          %406 = dma.vmem_to_hbm [thread:$0]  %s402, 64, %s404, %s368
        $region44: #{tpu_custom_call.1} parent=27 // pred_fallthru
          _
        // Predicated region
        $region45: #{tpu_custom_call.1} parent=27 // pred_check
          %p407 = pneg %p163
        $region46: #{tpu_custom_call.1} parent=27 // pred_check_branch
          %409 = sbr.rel (%p407) target = $region48
        $region47: #{tpu_custom_call.1} parent=27 // pred_region
          %411 = vsyncadd %s373, 0
          %s412 = sadd.s32 %s31, %s30
          %s413 = smul.addr %s412, 4
          %s414 = scalar_lea.hbm %s4, %s413
          %s416 = sshll.u32 %s376, 4
          %s417 = int_to_ptr.vmem [resolvable:$true] %s416
          %s418 = sshll.u32 %s414, 4
          %s419 = int_to_ptr.hbm [resolvable:$true] %s418
          %421 = dma.vmem_to_hbm [thread:$0]  %s417, 64, %s419, %s373
        $region48: #{tpu_custom_call.1} parent=27 // pred_fallthru
          _
      $region28: #{tpu_custom_call.1} parent=5 // pred_fallthru
        _
      %p422 = scmp.le.s32.totalorder 2, %s21
      // Predicated region
      $region49: #{tpu_custom_call.1} parent=5 // pred_check
        %p423 = pneg %p422
      $region50: #{tpu_custom_call.1} parent=5 // pred_check_branch
        %425 = sbr.rel (%p423) target = $region52
      $region51: #{tpu_custom_call.1} parent=5 // pred_region
        %s426 = ssub.s32 %s21, 2
        // Predicated region
        $region53: #{tpu_custom_call.1} parent=51 // pred_check
          %p427 = pneg %p113
        $region54: #{tpu_custom_call.1} parent=51 // pred_check_branch
          %429 = sbr.rel (%p427) target = $region56
        $region55: #{tpu_custom_call.1} parent=51 // pred_region
          %s430 = sand.u32 %s98, 1
          %s431 = scalar_lea.sflag [#allocation4], %s430
          %s432 = sand.u32 %s98, 1
          %s433 = smul.addr %s432, 4
          %s434 = scalar_lea.vmem [#allocation7], %s433
          %436 = dma.done %s431, 64
        $region56: #{tpu_custom_call.1} parent=51 // pred_fallthru
          _
        // Predicated region
        $region57: #{tpu_custom_call.1} parent=51 // pred_check
          %p437 = pneg %p141
        $region58: #{tpu_custom_call.1} parent=51 // pred_check_branch
          %439 = sbr.rel (%p437) target = $region60
        $region59: #{tpu_custom_call.1} parent=51 // pred_region
          %s440 = sand.u32 %s27, 1
          %s441 = scalar_lea.sflag [#allocation9], %s440
          %s442 = sand.u32 %s126, 1
          %s443 = smul.addr %s442, 4
          %s444 = scalar_lea.vmem [#allocation8], %s443
          %446 = dma.done %s441, 64
        $region60: #{tpu_custom_call.1} parent=51 // pred_fallthru
          _
        // Predicated region
        $region61: #{tpu_custom_call.1} parent=51 // pred_check
          %p447 = pneg %p169
        $region62: #{tpu_custom_call.1} parent=51 // pred_check_branch
          %449 = sbr.rel (%p447) target = $region64
        $region63: #{tpu_custom_call.1} parent=51 // pred_region
          %s450 = sand.u32 %s27, 1
          %s451 = scalar_lea.sflag [#allocation9], %s450
          %s452 = sand.u32 %s154, 1
          %s453 = smul.addr %s452, 4
          %s454 = scalar_lea.vmem [#allocation10], %s453
          %456 = dma.done %s451, 64
        $region64: #{tpu_custom_call.1} parent=51 // pred_fallthru
          _
      $region52: #{tpu_custom_call.1} parent=5 // pred_fallthru
        _
    $region6: #{tpu_custom_call.1} parent=1 // loop_footer
      %s25 = sadd.s32 1, %s21
    $region7: #{tpu_custom_call.1} parent=1 // loop_footer_branch
      %20 = sbr.rel target = $region3
    $region8: #{tpu_custom_call.1} parent=1 // loop_exit
      _
    %457 = vsyncpa [#allocation3], 1
    %s458 = scalar_lea.sflag [#allocation3], 1
    %459 = vsyncpa %s458, 1
    %460 = vsyncpa [#allocation6], 1
    %461 = vsyncpa [#allocation4], 1
    %s462 = scalar_lea.sflag [#allocation4], 1
    %463 = vsyncpa %s462, 1
    %464 = vsyncpa [#allocation9], 1
    %s465 = scalar_lea.sflag [#allocation9], 1
    %466 = vsyncpa %s465, 1

</llo_original>
